<compile_context>
chip_gen: v5e
topology: v5e:2x2
jax: 0.10.0
libtpu: 0.0.40
codegen_flags: <defaults>
</compile_context>

<pallas_src>
import functools
import math

import jax
import jax.numpy as jnp
from jax import lax
from jax.experimental import pallas as pl
from jax.experimental.pallas import tpu as pltpu


def _pick_tile(dim, preferred, align):
    """Largest tile <= preferred that divides dim and is a multiple of align.
    Full-extent blocks (dim <= preferred) are always legal; otherwise fall
    back to the full dim only if no aligned divisor exists."""
    if dim <= preferred:
        return dim
    start = (preferred // align) * align
    for cand in range(start, 0, -align):
        if dim % cand == 0:
            return cand
    return dim


# ----------------------------------------------------------------------------
# Tiled matmul kernel (fused q/k/v projection and output projection, no bias)
# bf16 operands, f32 VMEM accumulator, init/store via pl.when.
# ----------------------------------------------------------------------------
def _matmul_kernel(x_ref, w_ref, o_ref, acc_ref):
    @pl.when(pl.program_id(2) == 0)
    def _init():
        acc_ref[...] = jnp.zeros_like(acc_ref)

    acc_ref[...] += jnp.dot(
        x_ref[...], w_ref[...], preferred_element_type=jnp.float32
    )

    @pl.when(pl.program_id(2) == pl.num_programs(2) - 1)
    def _store():
        o_ref[...] = acc_ref[...].astype(o_ref.dtype)


def linear_no_bias(x2d, w_in_out, *, out_dtype=None, tm=256, tn=512, tk=512):
    """y = x2d @ w_in_out (weight already transposed to (in, out) and cast to
    the compute dtype).  Tiled and software-pipelined; reduction (K) axis is
    the innermost 'arbitrary' axis."""
    M, K = x2d.shape
    K2, N = w_in_out.shape
    assert K == K2
    out_dtype = x2d.dtype if out_dtype is None else out_dtype
    tm = _pick_tile(M, tm, 8)
    tn = _pick_tile(N, tn, 128)
    tk = _pick_tile(K, tk, 128)
    grid = (M // tm, N // tn, K // tk)
    return pl.pallas_call(
        _matmul_kernel,
        out_shape=jax.ShapeDtypeStruct((M, N), out_dtype),
        grid=grid,
        in_specs=[
            pl.BlockSpec((tm, tk), lambda i, j, kk: (i, kk)),
            pl.BlockSpec((tk, tn), lambda i, j, kk: (kk, j)),
        ],
        out_specs=pl.BlockSpec((tm, tn), lambda i, j, kk: (i, j)),
        scratch_shapes=[pltpu.VMEM((tm, tn), jnp.float32)],
        compiler_params=pltpu.CompilerParams(
            dimension_semantics=("parallel", "parallel", "arbitrary")
        ),
    )(x2d, w_in_out)


# ----------------------------------------------------------------------------
# Flash-style attention with additive bias, all heads per grid step.
#   out[b, q_tile, :] = concat_h softmax(q_h @ k_h^T + bias_h) @ v_h
# grid = (q_tiles, batch, kv_tiles); online softmax over the kv axis with
# m / l / acc VMEM scratch; single lane-dense (tq, H*D) store at the end.
# ----------------------------------------------------------------------------
def _flash_attn_bias_kernel(q_ref, k_ref, v_ref, bias_ref, o_ref,
                            m_ref, l_ref, acc_ref, *,
                            n_heads, d_kv, approx_recip):
    kv = pl.program_id(2)

    @pl.when(kv == 0)
    def _init():
        m_ref[...] = jnp.full_like(m_ref, -jnp.inf)
        l_ref[...] = jnp.zeros_like(l_ref)
        acc_ref[...] = jnp.zeros_like(acc_ref)

    # Static per-head loop; all per-head state flows through VMEM scratch refs
    # so live ranges stay bounded (no concatenate epilogue).
    # TODO(synk): on v6e/v7x a bf16 exp path (EUP bf16) could roughly halve the
    # softmax phase; kept in f32 here so the same kernel is valid on v5e.
    for h in range(n_heads):
        lo = h * d_kv
        qh = q_ref[0, :, lo:lo + d_kv].astype(jnp.bfloat16)   # (tq, D)
        kh = k_ref[0, :, lo:lo + d_kv].astype(jnp.bfloat16)   # (tk, D)
        vh = v_ref[0, :, lo:lo + d_kv].astype(jnp.bfloat16)   # (tk, D)
        # scores = q @ k^T * 1.0 + bias (T5 uses sm_scale = 1.0); contract the
        # shared D axis directly on the MXU (bf16 operands, f32 accumulation).
        s = lax.dot_general(
            qh, kh, (((1,), (1,)), ((), ())),
            preferred_element_type=jnp.float32,
        )
        s = s + bias_ref[0, h].astype(jnp.float32)             # (tq, tk)

        m_prev = m_ref[h]                                      # (tq, 1)
        m_new = jnp.maximum(m_prev, jnp.max(s, axis=-1, keepdims=True))
        alpha = jnp.exp(m_prev - m_new)
        p = jnp.exp(s - m_new)
        l_ref[h] = alpha * l_ref[h] + jnp.sum(p, axis=-1, keepdims=True)
        m_ref[h] = m_new
        acc_ref[:, lo:lo + d_kv] = alpha * acc_ref[:, lo:lo + d_kv] + jnp.dot(
            p.astype(jnp.bfloat16), vh, preferred_element_type=jnp.float32
        )

    @pl.when(kv == pl.num_programs(2) - 1)
    def _finalize():
        for h in range(n_heads):
            lo = h * d_kv
            if approx_recip:
                inv = pl.reciprocal(l_ref[h], approx=True)   # EUP vrcp
            else:
                inv = 1.0 / l_ref[h]
            acc_ref[:, lo:lo + d_kv] = acc_ref[:, lo:lo + d_kv] * inv
        # One lane-dense HBM store of all heads: (tq, H*D).
        o_ref[0] = acc_ref[...].astype(o_ref.dtype)


def attention_with_bias(qkv, bias, *, n_heads, d_kv, out_dtype,
                        tq=256, tkv=512, approx_recip=True):
    """qkv: (B, S, 3*H*D) fused projection; bias: (1, H, S, S) -> (B, S, H*D)."""
    B, S, three_hd = qkv.shape
    HD = n_heads * d_kv
    assert three_hd == 3 * HD
    Sk = S
    tq = _pick_tile(S, tq, 8)        # sublane axis of q/o blocks
    tkv = _pick_tile(Sk, tkv, 128)   # lane axis of the bias block
    grid = (S // tq, B, Sk // tkv)
    # NOTE(v7x megacore): two parallel axes (q tiles, batch); for B==1 and
    # S<=tq shrink tq so the parallel extent is >=2.

    if HD % 128 == 0:
        # Fused path: read q/k/v as lane-offset windows of the single qkv
        # tensor (block index 0/1/2 along the last axis) -> no HBM slice copies.
        q_in, k_in, v_in = qkv, qkv, qkv
        q_spec = pl.BlockSpec((1, tq, HD), lambda qi, b, kv: (b, qi, 0))
        k_spec = pl.BlockSpec((1, tkv, HD), lambda qi, b, kv: (b, kv, 1))
        v_spec = pl.BlockSpec((1, tkv, HD), lambda qi, b, kv: (b, kv, 2))
    else:
        # TODO(synk): HD not a multiple of 128 -> the lane-offset view of the
        # fused block is not (8,128)-legal; fall back to materialized slices.
        q_in = qkv[:, :, :HD]
        k_in = qkv[:, :, HD:2 * HD]
        v_in = qkv[:, :, 2 * HD:]
        q_spec = pl.BlockSpec((1, tq, HD), lambda qi, b, kv: (b, qi, 0))
        k_spec = pl.BlockSpec((1, tkv, HD), lambda qi, b, kv: (b, kv, 0))
        v_spec = pl.BlockSpec((1, tkv, HD), lambda qi, b, kv: (b, kv, 0))

    kernel = functools.partial(
        _flash_attn_bias_kernel,
        n_heads=n_heads, d_kv=d_kv, approx_recip=approx_recip,
    )
    return pl.pallas_call(
        kernel,
        out_shape=jax.ShapeDtypeStruct((B, S, HD), out_dtype),
        grid=grid,
        in_specs=[
            q_spec,
            k_spec,
            v_spec,
            pl.BlockSpec((1, n_heads, tq, tkv), lambda qi, b, kv: (0, 0, qi, kv)),
        ],
        out_specs=pl.BlockSpec((1, tq, HD), lambda qi, b, kv: (b, qi, 0)),
        scratch_shapes=[
            pltpu.VMEM((n_heads, tq, 1), jnp.float32),   # running max m
            pltpu.VMEM((n_heads, tq, 1), jnp.float32),   # running denom l
            pltpu.VMEM((tq, HD), jnp.float32),           # lane-dense acc
        ],
        compiler_params=pltpu.CompilerParams(
            dimension_semantics=("parallel", "parallel", "arbitrary"),
            vmem_limit_bytes=48 * 1024 * 1024,
        ),
    )(q_in, k_in, v_in, bias)


# ----------------------------------------------------------------------------
# Relative position bias (glue, plain JAX): bucket + embedding gather.
# The module must return position_bias, so it is materialized here anyway.
# ----------------------------------------------------------------------------
def _relative_position_bucket(relative_position, bidirectional, num_buckets,
                              max_distance):
    relative_buckets = jnp.zeros_like(relative_position)
    if bidirectional:
        num_buckets //= 2
        relative_buckets = relative_buckets + (
            (relative_position > 0).astype(jnp.int32) * num_buckets
        )
        relative_position = jnp.abs(relative_position)
    else:
        relative_position = -jnp.minimum(relative_position,
                                         jnp.zeros_like(relative_position))
    max_exact = num_buckets // 2
    is_small = relative_position < max_exact
    # Clamp to >= 1 before the log: positions < max_exact take the small branch
    # anyway, and this avoids log(0) -> -inf -> implementation-defined int cast.
    safe_rel = jnp.maximum(relative_position, 1).astype(jnp.float32)
    rel_if_large = max_exact + (
        jnp.log(safe_rel / max_exact)
        / math.log(max_distance / max_exact)
        * (num_buckets - max_exact)
    ).astype(jnp.int32)
    rel_if_large = jnp.minimum(rel_if_large, num_buckets - 1)
    relative_buckets = relative_buckets + jnp.where(
        is_small, relative_position, rel_if_large
    )
    return relative_buckets


def compute_bias(rel_bias_weight, query_length, key_length, *, bidirectional,
                 num_buckets, max_distance, dtype):
    context_position = jnp.arange(query_length, dtype=jnp.int32)[:, None]
    memory_position = jnp.arange(key_length, dtype=jnp.int32)[None, :]
    relative_position = memory_position - context_position
    buckets = _relative_position_bucket(
        relative_position, bidirectional, num_buckets, max_distance
    )
    values = rel_bias_weight[buckets]                              # (Sq, Sk, H)
    values = jnp.transpose(values, (2, 0, 1))[None].astype(dtype)  # (1,H,Sq,Sk)
    return values


# ----------------------------------------------------------------------------
# Weight pre-packing (done once at load time, not per forward call).
# torch Linear weights are (out, in); transpose + concat + bf16 cast here.
# ----------------------------------------------------------------------------
def pack_params(params, compute_dtype=jnp.bfloat16):
    wqkv_t = jnp.concatenate(
        [params["wq"].T, params["wk"].T, params["wv"].T], axis=1
    ).astype(compute_dtype)                     # (d_model, 3*inner)
    return {
        "wqkv_t": wqkv_t,
        "wo_t": params["wo"].T.astype(compute_dtype),   # (inner, d_model)
        "relative_attention_bias": params["relative_attention_bias"],
    }


# ----------------------------------------------------------------------------
# Full forward (matches T5TritonBasicAttention.forward for the self-attention,
# mask=None, no-cache path). Returns (attn_output, present_kv, position_bias).
# ----------------------------------------------------------------------------
def t5_triton_basic_attention_forward(packed_params, hidden_states, config,
                                      *, mask=None,
                                      compute_dtype=jnp.bfloat16,
                                      approx_recip=True):
    if config["is_decoder"] or mask is not None:
        # TODO(synk): causal masking (is_decoder=True), attention masks and the
        # past_key_value cache path are not wired; guard instead of being
        # silently wrong.
        raise NotImplementedError(
            "Only the encoder self-attention path (no mask, no cache) is "
            "implemented in the Pallas kernel."
        )

    B, S, d_model = hidden_states.shape
    n_heads = config["num_heads"]
    d_kv = config["d_kv"]
    inner_dim = n_heads * d_kv

    # Fused q/k/v projection: one matmul, one pass over x, lane-dense N=3*inner.
    x2d = hidden_states.reshape(B * S, d_model).astype(compute_dtype)
    qkv = linear_no_bias(
        x2d, packed_params["wqkv_t"], out_dtype=compute_dtype
    ).reshape(B, S, 3 * inner_dim)

    # Position bias (the module returns it, so it is materialized regardless);
    # returned in the query dtype, fed to the kernel in the compute dtype.
    position_bias = compute_bias(
        packed_params["relative_attention_bias"], S, S,
        bidirectional=not config["is_decoder"],
        num_buckets=config["relative_attention_num_buckets"],
        max_distance=config["relative_attention_max_distance"],
        dtype=hidden_states.dtype,
    )

    # Flash-style attention with additive bias, sm_scale = 1.0.
    attn = attention_with_bias(
        qkv, position_bias.astype(compute_dtype),
        n_heads=n_heads, d_kv=d_kv, out_dtype=compute_dtype,
        approx_recip=approx_recip,
    )  # (B, S, inner)

    # Output projection; attention output already in (B, S, inner) layout.
    out = linear_no_bias(
        attn.reshape(B * S, inner_dim), packed_params["wo_t"],
        out_dtype=hidden_states.dtype,
    ).reshape(B, S, d_model)

    present_key_value_state = None
    return out, present_key_value_state, position_bias


# ----------------------------------------------------------------------------
# Pure-JAX (f32) reference for a sanity check
# ----------------------------------------------------------------------------
def reference_forward(params, hidden_states, config):
    B, S, d_model = hidden_states.shape
    H, D = config["num_heads"], config["d_kv"]
    q = (hidden_states @ params["wq"].T).reshape(B, S, H, D).transpose(0, 2, 1, 3)
    k = (hidden_states @ params["wk"].T).reshape(B, S, H, D).transpose(0, 2, 1, 3)
    v = (hidden_states @ params["wv"].T).reshape(B, S, H, D).transpose(0, 2, 1, 3)
    bias = compute_bias(
        params["relative_attention_bias"], S, S,
        bidirectional=not config["is_decoder"],
        num_buckets=config["relative_attention_num_buckets"],
        max_distance=config["relative_attention_max_distance"],
        dtype=q.dtype,
    )
    scores = jnp.einsum("bhqd,bhkd->bhqk", q, k) + bias
    p = jax.nn.softmax(scores, axis=-1)
    attn = jnp.einsum("bhqk,bhkd->bhqd", p, v)
    attn = attn.transpose(0, 2, 1, 3).reshape(B, S, H * D)
    return attn @ params["wo"].T


if __name__ == "__main__":
    # Small shapes; inner_dim = num_heads * d_kv = 128 so the fused-qkv
    # lane-offset path (real T5 configs all have inner_dim % 128 == 0) is
    # exercised.
    config = dict(
        d_model=64,
        d_kv=16,
        num_heads=8,
        relative_attention_num_buckets=32,
        relative_attention_max_distance=128,
        is_decoder=False,
        dropout_rate=0.0,
    )
    B, S = 2, 16
    d_model = config["d_model"]
    inner = config["num_heads"] * config["d_kv"]

    key = jax.random.PRNGKey(0)
    k_x, k_q, k_k, k_v, k_o, k_b = jax.random.split(key, 6)

    params = {
        "wq": 0.05 * jax.random.normal(k_q, (inner, d_model), jnp.float32),
        "wk": 0.05 * jax.random.normal(k_k, (inner, d_model), jnp.float32),
        "wv": 0.05 * jax.random.normal(k_v, (inner, d_model), jnp.float32),
        "wo": 0.05 * jax.random.normal(k_o, (d_model, inner), jnp.float32),
        "relative_attention_bias": 0.05 * jax.random.normal(
            k_b, (config["relative_attention_num_buckets"], config["num_heads"]),
            jnp.float32),
    }
    hidden_states = jax.random.normal(k_x, (B, S, d_model), jnp.float32)

    packed = pack_params(params)  # one-time weight transpose/concat/bf16 cast

    out, present_kv, position_bias = t5_triton_basic_attention_forward(
        packed, hidden_states, config
    )
    out = jax.block_until_ready(out)

    ref = reference_forward(params, hidden_states, config)
    assert out.shape == (B, S, d_model)
    assert out.dtype == hidden_states.dtype
    assert position_bias.shape == (1, config["num_heads"], S, S)
    # Tolerance covers bf16 matmul operands (f32 accumulation) and the EUP
    # approximate-reciprocal softmax normalization (set approx_recip=False and
    # compute_dtype=jnp.float32 for strict parity testing).
    assert jnp.allclose(out, ref, atol=3e-2, rtol=3e-2), "mismatch vs reference"

    print("KERNEL_OK")
</pallas_src>

<mosaic_0001>
module attributes {stable_mosaic.version = 11 : i64} {
  func.func @_matmul_kernel(%arg0: i32, %arg1: i32, %arg2: i32, %arg3: memref<32x64xbf16, #tpu.memory_space<vmem>>, %arg4: memref<64x384xbf16, #tpu.memory_space<vmem>>, %arg5: memref<32x384xbf16, #tpu.memory_space<vmem>>, %arg6: memref<32x384xf32, #tpu.memory_space<vmem>>) attributes {dimension_semantics = [#tpu.dimension_semantics<parallel>, #tpu.dimension_semantics<parallel>, #tpu.dimension_semantics<arbitrary>], iteration_bounds = array<i64: 1, 1, 1>, scalar_prefetch = 0 : i64, scratch_operands = 1 : i64, tpu.core_type = #tpu.core_type<tc>, window_params = [{transform_indices = @transform_0, window_bounds = array<i64: 32, 64>}, {transform_indices = @transform_1, window_bounds = array<i64: 64, 384>}, {transform_indices = @transform_2, window_bounds = array<i64: 32, 384>}]} {
    %c0_i32 = arith.constant 0 : i32
    %0 = arith.cmpi eq, %arg2, %c0_i32 : i32
    %1 = arith.extui %0 : i1 to i32
    %c0_i32_0 = arith.constant 0 : i32
    %2 = arith.cmpi ne, %1, %c0_i32_0 : i32
    scf.if %2 {
      %cst_10 = arith.constant 0.000000e+00 : f32
      %12 = vector.broadcast %cst_10 : f32 to vector<32x384xf32>
      %c0_11 = arith.constant 0 : index
      %c0_12 = arith.constant 0 : index
      %13 = vector.load %arg6[%c0_11, %c0_12] : memref<32x384xf32, #tpu.memory_space<vmem>>, vector<32x384xf32>
      tpu.vector_store %arg6[%c0_11, %c0_12], %12 {strides = array<i32>} : memref<32x384xf32, #tpu.memory_space<vmem>>, vector<32x384xf32>,
    } else {
    }
    %c0 = arith.constant 0 : index
    %c0_1 = arith.constant 0 : index
    %3 = vector.load %arg6[%c0, %c0_1] : memref<32x384xf32, #tpu.memory_space<vmem>>, vector<32x384xf32>
    %c0_2 = arith.constant 0 : index
    %c0_3 = arith.constant 0 : index
    %4 = vector.load %arg3[%c0_2, %c0_3] : memref<32x64xbf16, #tpu.memory_space<vmem>>, vector<32x64xbf16>
    %c0_4 = arith.constant 0 : index
    %c0_5 = arith.constant 0 : index
    %5 = vector.load %arg4[%c0_4, %c0_5] : memref<64x384xbf16, #tpu.memory_space<vmem>>, vector<64x384xbf16>
    %cst = arith.constant dense<0.000000e+00> : vector<32x384xf32>
    %6 = tpu.matmul %4, %5, %cst {dimension_numbers = #tpu.dot_dimension_numbers<[1], [0], [0], [1], [0, 0, 1, 1], [], []>} : vector<32x64xbf16>, vector<64x384xbf16>, vector<32x384xf32> -> vector<32x384xf32>
    %7 = arith.addf %3, %6 : vector<32x384xf32>
    %c0_6 = arith.constant 0 : index
    %c0_7 = arith.constant 0 : index
    %8 = vector.load %arg6[%c0_6, %c0_7] : memref<32x384xf32, #tpu.memory_space<vmem>>, vector<32x384xf32>
    tpu.vector_store %arg6[%c0_6, %c0_7], %7 {strides = array<i32>} : memref<32x384xf32, #tpu.memory_space<vmem>>, vector<32x384xf32>,
    %c0_i32_8 = arith.constant 0 : i32
    %9 = arith.cmpi eq, %arg2, %c0_i32_8 : i32
    %10 = arith.extui %9 : i1 to i32
    %c0_i32_9 = arith.constant 0 : i32
    %11 = arith.cmpi ne, %10, %c0_i32_9 : i32
    scf.if %11 {
      %c0_10 = arith.constant 0 : index
      %c0_11 = arith.constant 0 : index
      %12 = vector.load %arg6[%c0_10, %c0_11] : memref<32x384xf32, #tpu.memory_space<vmem>>, vector<32x384xf32>
      %13 = arith.truncf %12 : vector<32x384xf32> to vector<32x384xbf16>
      %c0_12 = arith.constant 0 : index
      %c0_13 = arith.constant 0 : index
      %14 = vector.load %arg5[%c0_12, %c0_13] : memref<32x384xbf16, #tpu.memory_space<vmem>>, vector<32x384xbf16>
      tpu.vector_store %arg5[%c0_12, %c0_13], %13 {strides = array<i32>} : memref<32x384xbf16, #tpu.memory_space<vmem>>, vector<32x384xbf16>,
    } else {
    }
    return
  }
  func.func @transform_0(%arg0: i32, %arg1: i32, %arg2: i32) -> (i32, i32) {
    %c0_i32 = arith.constant 0 : i32
    return %arg0, %arg2 : i32, i32
  }
  func.func @transform_1(%arg0: i32, %arg1: i32, %arg2: i32) -> (i32, i32) {
    %c0_i32 = arith.constant 0 : i32
    return %arg2, %arg1 : i32, i32
  }
  func.func @transform_2(%arg0: i32, %arg1: i32, %arg2: i32) -> (i32, i32) {
    %c0_i32 = arith.constant 0 : i32
    return %arg0, %arg1 : i32, i32
  }
}

</mosaic_0001>

<llo_original>
// kernel: tpu_custom_call.1
$region0: #{tpu_custom_call.1}
  #allocation0 [shape = 'u32[]', space=smem, size = 0x4, offset = 0x4, fixed_abs, tag = 'smem constant byte address 0x4 - core index']
  #allocation1 [shape = 'u32[72,128]{1,0:T(1,128)}', space=vmem, size = 0x9000, scoped, tag = 'internal scratch']
  #allocation2 [shape = 'f32[32,384]{1,0:T(8,128)}', space=vmem, size = 0xc000, scoped, tag = 'scratch operand']
  %s0 = inlined_call_operand.hbm [shape: bf16[32,64], index: 0, kind: input, shape index: {}]
  %s1 = inlined_call_operand.hbm [shape: bf16[64,384], index: 1, kind: input, shape index: {}]
  %s2 = inlined_call_operand.hbm [shape: bf16[32,384], index: 2, kind: output, shape index: {}]
  %s3 = sld [smem:[#allocation0]]
  $region34: #{tpu_custom_call.1} parent=0
    _
  %s5 = ssub.s32 1, %s3
  %s6 = scalar_select 0, %s5, %s3
  $region1: #{tpu_custom_call.1} parent=0
    #allocation3 [shape = 'u8[8192]{0}', space=vmem, size = 0x2000, scoped, tag = 'input window, operand 0, single buffered']
    #allocation4 [shape = 's32[1]{0}', space=sflag, size = 0x4, scoped, tag = 'scoped memory for tpu_custom_call.1']
    #allocation5 [shape = 's32[1]{0}', space=sflag, size = 0x4, scoped, tag = 'scoped memory for tpu_custom_call.1']
    #allocation6 [shape = 'u8[49152]{0}', space=vmem, size = 0xc000, scoped, tag = 'input window, operand 1, single buffered']
    #allocation7 [shape = 's32[1]{0}', space=sflag, size = 0x4, scoped, tag = 'scoped memory for tpu_custom_call.1']
    #allocation8 [shape = 'u8[24576]{0}', space=vmem, size = 0x6000, scoped, tag = 'output window, operand 0, single buffered']
    %7 = vsyncpa [#allocation4], 0
    %8 = vsyncpa [#allocation7], 0
    %9 = vsyncpa [#allocation5], 0
    // Predicated region
    $region2: #{tpu_custom_call.1} parent=1 // pred_check
      _
    $region3: #{tpu_custom_call.1} parent=1 // pred_check_branch
      %11 = sbr.rel (0) target = $region5
    $region4: #{tpu_custom_call.1} parent=1 // pred_region
      %13 = vsyncadd [#allocation4], 0
      %s14 = sshll.u32 %s0, 4
      %s15 = int_to_ptr.hbm [resolvable:$true] %s14
      %s16 = sshll.u32 [#allocation3], 4
      %s17 = int_to_ptr.vmem [resolvable:$true] %s16
      %22 = dma.hbm_to_vmem [thread:$0]  %s15, 256, %s17, [#allocation4], 64, 64, 4
    $region5: #{tpu_custom_call.1} parent=1 // pred_fallthru
      _
    // Predicated region
    $region6: #{tpu_custom_call.1} parent=1 // pred_check
      _
    $region7: #{tpu_custom_call.1} parent=1 // pred_check_branch
      %24 = sbr.rel (0) target = $region9
    $region8: #{tpu_custom_call.1} parent=1 // pred_region
      %26 = vsyncadd [#allocation7], 0
      %s27 = sshll.u32 %s1, 4
      %s28 = int_to_ptr.hbm [resolvable:$true] %s27
      %s29 = sshll.u32 [#allocation6], 4
      %s30 = int_to_ptr.vmem [resolvable:$true] %s29
      %35 = dma.hbm_to_vmem [thread:$0]  %s28, 1536, %s30, [#allocation7], 192, 192, 12
    $region9: #{tpu_custom_call.1} parent=1 // pred_fallthru
      _
    // Predicated region
    $region10: #{tpu_custom_call.1} parent=1 // pred_check
      _
    $region11: #{tpu_custom_call.1} parent=1 // pred_check_branch
      %37 = sbr.rel (0) target = $region13
    $region12: #{tpu_custom_call.1} parent=1 // pred_region
      %39 = dma.done [#allocation4], 256
    $region13: #{tpu_custom_call.1} parent=1 // pred_fallthru
      _
    // Predicated region
    $region14: #{tpu_custom_call.1} parent=1 // pred_check
      _
    $region15: #{tpu_custom_call.1} parent=1 // pred_check_branch
      %41 = sbr.rel (0) target = $region17
    $region16: #{tpu_custom_call.1} parent=1 // pred_region
      %43 = dma.done [#allocation7], 1536
    $region17: #{tpu_custom_call.1} parent=1 // pred_fallthru
      _
    %p45 = scmp.eq.s32.totalorder 0, 0
    // Predicated region
    $region18: #{tpu_custom_call.1} parent=1 // pred_check
      %p46 = pneg %p45
    $region19: #{tpu_custom_call.1} parent=1 // pred_check_branch
      %48 = sbr.rel (%p46) target = $region21
    $region20: #{tpu_custom_call.1} parent=1 // pred_region
      %49 = vst [vmem:[#allocation2] sm:$0xff] 0.0
      %50 = vst [vmem:[#allocation2 + $0x8] sm:$0xff] 0.0
      %51 = vst [vmem:[#allocation2 + $0x10] sm:$0xff] 0.0
      %52 = vst [vmem:[#allocation2 + $0x18] sm:$0xff] 0.0
      %53 = vst [vmem:[#allocation2 + $0x20] sm:$0xff] 0.0
      %54 = vst [vmem:[#allocation2 + $0x28] sm:$0xff] 0.0
      %55 = vst [vmem:[#allocation2 + $0x30] sm:$0xff] 0.0
      %56 = vst [vmem:[#allocation2 + $0x38] sm:$0xff] 0.0
      %57 = vst [vmem:[#allocation2 + $0x40] sm:$0xff] 0.0
      %58 = vst [vmem:[#allocation2 + $0x48] sm:$0xff] 0.0
      %59 = vst [vmem:[#allocation2 + $0x50] sm:$0xff] 0.0
      %60 = vst [vmem:[#allocation2 + $0x58] sm:$0xff] 0.0
    $region21: #{tpu_custom_call.1} parent=1 // pred_fallthru
      _
    %v61 = vld [vmem:[#allocation2] sm:$0xff]
    %v62 = vld [vmem:[#allocation2 + $0x8] sm:$0xff]
    %v63 = vld [vmem:[#allocation2 + $0x10] sm:$0xff]
    %v64 = vld [vmem:[#allocation2 + $0x18] sm:$0xff]
    %v65 = vld [vmem:[#allocation2 + $0x20] sm:$0xff]
    %v66 = vld [vmem:[#allocation2 + $0x28] sm:$0xff]
    %v67 = vld [vmem:[#allocation2 + $0x30] sm:$0xff]
    %v68 = vld [vmem:[#allocation2 + $0x38] sm:$0xff]
    %v69 = vld [vmem:[#allocation2 + $0x40] sm:$0xff]
    %v70 = vld [vmem:[#allocation2 + $0x48] sm:$0xff]
    %v71 = vld [vmem:[#allocation2 + $0x50] sm:$0xff]
    %v72 = vld [vmem:[#allocation2 + $0x58] sm:$0xff]
    %v73 = vld [vmem:[#allocation3] sm:$0xf]
    %v74 = vld [vmem:[#allocation3 + $0x4] sm:$0xf]
    %v75 = vld [vmem:[#allocation3 + $0x8] sm:$0xf]
    %v76 = vld [vmem:[#allocation3 + $0xc] sm:$0xf]
    %v77 = vld [vmem:[#allocation6] sm:$0xff]
    %v78 = vld [vmem:[#allocation6 + $0x8] sm:$0xf]
    %v79 = vld [vmem:[#allocation6 + $0xc] sm:$0xff]
    %v80 = vld [vmem:[#allocation6 + $0x14] sm:$0xf]
    %v81 = vld [vmem:[#allocation6 + $0x18] sm:$0xff]
    %v82 = vld [vmem:[#allocation6 + $0x20] sm:$0xf]
    %v83 = vld [vmem:[#allocation6 + $0x24] sm:$0xff]
    %v84 = vld [vmem:[#allocation6 + $0x2c] sm:$0xf]
    %v85 = vld [vmem:[#allocation6 + $0x30] sm:$0xff]
    %v86 = vld [vmem:[#allocation6 + $0x38] sm:$0xf]
    %v87 = vld [vmem:[#allocation6 + $0x3c] sm:$0xff]
    %v88 = vld [vmem:[#allocation6 + $0x44] sm:$0xf]
    %v89 = vld [vmem:[#allocation6 + $0x48] sm:$0xff]
    %v90 = vld [vmem:[#allocation6 + $0x50] sm:$0xf]
    %v91 = vld [vmem:[#allocation6 + $0x54] sm:$0xff]
    %v92 = vld [vmem:[#allocation6 + $0x5c] sm:$0xf]
    %v97 = vunpack.c.l.b16 %v73
    %v98 = vunpack.c.l.b16 %v74
    %v99 = vunpack.c.l.b16 %v75
    %v100 = vunpack.c.l.b16 %v76
    %v101 = vpack.c.b16 %v98, %v97
    %v102 = vpack.c.b16 %v100, %v99
    %v119 = vunpack.c.l.b16 %v77
    %v120 = vunpack.c.h.b16 %v77
    %v121 = vunpack.c.l.b16 %v78
    %v122 = vunpack.c.l.b16 %v79
    %v123 = vunpack.c.h.b16 %v79
    %v124 = vunpack.c.l.b16 %v80
    %v125 = vunpack.c.l.b16 %v81
    %v126 = vunpack.c.h.b16 %v81
    %v127 = vunpack.c.l.b16 %v82
    %v128 = vunpack.c.l.b16 %v83
    %v129 = vunpack.c.h.b16 %v83
    %v130 = vunpack.c.l.b16 %v84
    %v131 = vunpack.c.l.b16 %v85
    %v132 = vunpack.c.h.b16 %v85
    %v133 = vunpack.c.l.b16 %v86
    %v134 = vunpack.c.l.b16 %v87
    %v135 = vunpack.c.h.b16 %v87
    %v136 = vunpack.c.l.b16 %v88
    %v137 = vunpack.c.l.b16 %v89
    %v138 = vunpack.c.h.b16 %v89
    %v139 = vunpack.c.l.b16 %v90
    %v140 = vunpack.c.l.b16 %v91
    %v141 = vunpack.c.h.b16 %v91
    %v142 = vunpack.c.l.b16 %v92
    %v143 = vpack.c.b16 %v122, %v119
    %v144 = vpack.c.b16 %v123, %v120
    %v145 = vpack.c.b16 %v124, %v121
    %v146 = vpack.c.b16 %v128, %v125
    %v147 = vpack.c.b16 %v129, %v126
    %v148 = vpack.c.b16 %v130, %v127
    %v149 = vpack.c.b16 %v134, %v131
    %v150 = vpack.c.b16 %v135, %v132
    %v151 = vpack.c.b16 %v136, %v133
    %v152 = vpack.c.b16 %v140, %v137
    %v153 = vpack.c.b16 %v141, %v138
    %v154 = vpack.c.b16 %v142, %v139
    %vm167 = vcmask 523264
    %v169 = vsel %vm167, %v101, 0
    %v172 = vsel %vm167, %v102, 0
    %174 = vmatpush.bf16.msra.mxu0 0
    %175 = vmatpush.bf16.msra.mxu0 0
    %176 = vmatpush.bf16.msra.mxu0 0
    %177 = vmatpush.bf16.msra.mxu0 0
    %178 = vmatpush.bf16.msra.mxu0 %v152
    %179 = vmatpush.bf16.msra.mxu0 %v149
    %180 = vmatpush.bf16.msra.mxu0 %v146
    %181 = vmatpush.bf16.msra.mxu0 %v143
    %182 = vmatmul.bf16.gmra.mxu0 %v169
    %v183 = vpop.f32.mrf.mxu0
    %v184 = vadd.f32 0.0, %v183
    %v185 = vpop.f32.mrf.mxu0
    %v186 = vadd.f32 0.0, %v185
    %187 = vmatmul.bf16.gmra.mxu0 %v172
    %v188 = vpop.f32.mrf.mxu0
    %v189 = vadd.f32 0.0, %v188
    %v190 = vpop.f32.mrf.mxu0
    %v191 = vadd.f32 0.0, %v190
    %192 = vdwg.mxu0
    %193 = vmatpush.bf16.msra.mxu0 0
    %194 = vmatpush.bf16.msra.mxu0 0
    %195 = vmatpush.bf16.msra.mxu0 0
    %196 = vmatpush.bf16.msra.mxu0 0
    %197 = vmatpush.bf16.msra.mxu0 %v153
    %198 = vmatpush.bf16.msra.mxu0 %v150
    %199 = vmatpush.bf16.msra.mxu0 %v147
    %200 = vmatpush.bf16.msra.mxu0 %v144
    %201 = vmatmul.bf16.gmra.mxu0 %v169
    %v202 = vpop.f32.mrf.mxu0
    %v203 = vadd.f32 0.0, %v202
    %v204 = vpop.f32.mrf.mxu0
    %v205 = vadd.f32 0.0, %v204
    %206 = vmatmul.bf16.gmra.mxu0 %v172
    %v207 = vpop.f32.mrf.mxu0
    %v208 = vadd.f32 0.0, %v207
    %v209 = vpop.f32.mrf.mxu0
    %v210 = vadd.f32 0.0, %v209
    %211 = vdwg.mxu0
    %212 = vmatpush.bf16.msra.mxu0 0
    %213 = vmatpush.bf16.msra.mxu0 0
    %214 = vmatpush.bf16.msra.mxu0 0
    %215 = vmatpush.bf16.msra.mxu0 0
    %216 = vmatpush.bf16.msra.mxu0 %v154
    %217 = vmatpush.bf16.msra.mxu0 %v151
    %218 = vmatpush.bf16.msra.mxu0 %v148
    %219 = vmatpush.bf16.msra.mxu0 %v145
    %220 = vmatmul.bf16.gmra.mxu0 %v169
    %v221 = vpop.f32.mrf.mxu0
    %v222 = vadd.f32 0.0, %v221
    %v223 = vpop.f32.mrf.mxu0
    %v224 = vadd.f32 0.0, %v223
    %225 = vmatmul.bf16.gmra.mxu0 %v172
    %v226 = vpop.f32.mrf.mxu0
    %v227 = vadd.f32 0.0, %v226
    %v228 = vpop.f32.mrf.mxu0
    %v229 = vadd.f32 0.0, %v228
    %230 = vdwg.mxu0
    %v231 = vadd.f32 %v61, %v184
    %v232 = vadd.f32 %v62, %v203
    %v233 = vadd.f32 %v63, %v222
    %v234 = vadd.f32 %v64, %v186
    %v235 = vadd.f32 %v65, %v205
    %v236 = vadd.f32 %v66, %v224
    %v237 = vadd.f32 %v67, %v189
    %v238 = vadd.f32 %v68, %v208
    %v239 = vadd.f32 %v69, %v227
    %v240 = vadd.f32 %v70, %v191
    %v241 = vadd.f32 %v71, %v210
    %v242 = vadd.f32 %v72, %v229
    %243 = vst [vmem:[#allocation2] sm:$0xff] %v231
    %244 = vst [vmem:[#allocation2 + $0x8] sm:$0xff] %v232
    %245 = vst [vmem:[#allocation2 + $0x10] sm:$0xff] %v233
    %246 = vst [vmem:[#allocation2 + $0x18] sm:$0xff] %v234
    %247 = vst [vmem:[#allocation2 + $0x20] sm:$0xff] %v235
    %248 = vst [vmem:[#allocation2 + $0x28] sm:$0xff] %v236
    %249 = vst [vmem:[#allocation2 + $0x30] sm:$0xff] %v237
    %250 = vst [vmem:[#allocation2 + $0x38] sm:$0xff] %v238
    %251 = vst [vmem:[#allocation2 + $0x40] sm:$0xff] %v239
    %252 = vst [vmem:[#allocation2 + $0x48] sm:$0xff] %v240
    %253 = vst [vmem:[#allocation2 + $0x50] sm:$0xff] %v241
    %254 = vst [vmem:[#allocation2 + $0x58] sm:$0xff] %v242
    // Predicated region
    $region22: #{tpu_custom_call.1} parent=1 // pred_check
      %p255 = pneg %p45
    $region23: #{tpu_custom_call.1} parent=1 // pred_check_branch
      %257 = sbr.rel (%p255) target = $region25
    $region24: #{tpu_custom_call.1} parent=1 // pred_region
      %v258 = vld [vmem:[#allocation2] sm:$0xff]
      %v259 = vld [vmem:[#allocation2 + $0x8] sm:$0xff]
      %v260 = vld [vmem:[#allocation2 + $0x10] sm:$0xff]
      %v261 = vld [vmem:[#allocation2 + $0x18] sm:$0xff]
      %v262 = vld [vmem:[#allocation2 + $0x20] sm:$0xff]
      %v263 = vld [vmem:[#allocation2 + $0x28] sm:$0xff]
      %v264 = vld [vmem:[#allocation2 + $0x30] sm:$0xff]
      %v265 = vld [vmem:[#allocation2 + $0x38] sm:$0xff]
      %v266 = vld [vmem:[#allocation2 + $0x40] sm:$0xff]
      %v267 = vld [vmem:[#allocation2 + $0x48] sm:$0xff]
      %v268 = vld [vmem:[#allocation2 + $0x50] sm:$0xff]
      %v269 = vld [vmem:[#allocation2 + $0x58] sm:$0xff]
      %v270 = vpack.c.bf16 %v259, %v258
      %v271 = vpack.c.bf16 %v260, %v260
      %v272 = vpack.c.bf16 %v262, %v261
      %v273 = vpack.c.bf16 %v263, %v263
      %v274 = vpack.c.bf16 %v265, %v264
      %v275 = vpack.c.bf16 %v266, %v266
      %v276 = vpack.c.bf16 %v268, %v267
      %v277 = vpack.c.bf16 %v269, %v269
      %278 = vst [vmem:[#allocation8] sm:$0xff] %v270
      %279 = vst [vmem:[#allocation8 + $0x8] sm:$0xf] %v271
      %280 = vst [vmem:[#allocation8 + $0xc] sm:$0xff] %v272
      %281 = vst [vmem:[#allocation8 + $0x14] sm:$0xf] %v273
      %282 = vst [vmem:[#allocation8 + $0x18] sm:$0xff] %v274
      %283 = vst [vmem:[#allocation8 + $0x20] sm:$0xf] %v275
      %284 = vst [vmem:[#allocation8 + $0x24] sm:$0xff] %v276
      %285 = vst [vmem:[#allocation8 + $0x2c] sm:$0xf] %v277
    $region25: #{tpu_custom_call.1} parent=1 // pred_fallthru
      _
    // Predicated region
    $region26: #{tpu_custom_call.1} parent=1 // pred_check
      _
    $region27: #{tpu_custom_call.1} parent=1 // pred_check_branch
      %287 = sbr.rel (0) target = $region29
    $region28: #{tpu_custom_call.1} parent=1 // pred_region
      %289 = vsyncadd [#allocation5], 0
      %s290 = sshll.u32 [#allocation8], 4
      %s291 = int_to_ptr.vmem [resolvable:$true] %s290
      %s292 = sshll.u32 %s2, 4
      %s293 = int_to_ptr.hbm [resolvable:$true] %s292
      %298 = dma.vmem_to_hbm [thread:$0]  %s291, 768, %s293, [#allocation5], 192, 192, 12
    $region29: #{tpu_custom_call.1} parent=1 // pred_fallthru
      _
    // Predicated region
    $region30: #{tpu_custom_call.1} parent=1 // pred_check
      _
    $region31: #{tpu_custom_call.1} parent=1 // pred_check_branch
      %300 = sbr.rel (0) target = $region33
    $region32: #{tpu_custom_call.1} parent=1 // pred_region
      %302 = dma.done [#allocation5], 768
    $region33: #{tpu_custom_call.1} parent=1 // pred_fallthru
      _
    %303 = vsyncpa [#allocation4], 1
    %304 = vsyncpa [#allocation7], 1
    %305 = vsyncpa [#allocation5], 1

</llo_original>
